<compile_context>
chip_gen: v6e
topology: v6e:2x2x1
jax: 0.10.0
libtpu: 0.0.40
codegen_flags: <defaults>
</compile_context>

<pallas_src>
import functools
import math

import jax
import jax.numpy as jnp
from jax.experimental import pallas as pl
from jax.experimental.pallas import tpu as pltpu


# ----------------------------------------------------------------------------
# Parameter ("buffer") setup — deterministic, mirrors nn.Module.__init__
# ----------------------------------------------------------------------------
def make_positional_encoding_table(max_len: int, d_model: int,
                                   dtype=jnp.float32) -> jnp.ndarray:
    position = jnp.arange(max_len, dtype=jnp.float32)[:, None]              # (L, 1)
    div_term = jnp.exp(jnp.arange(0, d_model, 2, dtype=jnp.float32)
                       * (-math.log(10000.0) / d_model))                    # (D/2,)
    ang = position * div_term                                                # (L, D/2)
    pe = jnp.zeros((max_len, d_model), jnp.float32)
    pe = pe.at[:, 0::2].set(jnp.sin(ang))
    pe = pe.at[:, 1::2].set(jnp.cos(ang))
    return pe.astype(dtype)                                                  # (L, D)


# ----------------------------------------------------------------------------
# Tiling helpers
# ----------------------------------------------------------------------------
def _row_tile(n_rows: int, cap: int = 256) -> int:
    """Batch-row tile: full dim if small, else the largest multiple-of-8
    divisor of n_rows that is <= cap (satisfies the sublane constraint)."""
    if n_rows <= cap:
        return n_rows
    best = None
    for t in range(8, cap + 1, 8):
        if n_rows % t == 0:
            best = t
    return best if best is not None else n_rows


def _col_tile(n_cols: int, rows_per_block: int, itemsize: int,
              target_bytes: int = 2 << 20) -> int:
    """Lane tile: largest multiple-of-128 divisor of n_cols whose block stays
    under ~target_bytes per buffer; falls back to the full width when n_cols
    is not lane-aligned (full-dim blocks are always legal)."""
    if n_cols % 128 != 0:
        return n_cols
    best = 128
    n = n_cols // 128
    for m in range(1, n + 1):
        if n % m == 0:
            tile = m * 128
            if rows_per_block * tile * itemsize <= target_bytes:
                best = tile
    return best


# ----------------------------------------------------------------------------
# Kernels
# ----------------------------------------------------------------------------
def _pe_add_kernel(x_ref, pe_ref, o_ref):
    # x_ref: (tb, tc), pe_ref: (1, tc)  -> single VPU broadcast-add per vreg.
    o_ref[...] = x_ref[...] + pe_ref[...]


def _pe_add_dropout_kernel(x_ref, pe_ref, keep_ref, o_ref, *, scale):
    # keep_ref holds {0, 1} in x.dtype; `scale` = 1/(1-p) baked in as a weakly
    # typed Python float so the math stays in x.dtype (bf16 stays bf16).
    o_ref[...] = (x_ref[...] + pe_ref[...]) * (keep_ref[...] * scale)


# ----------------------------------------------------------------------------
# Wrapper
# ----------------------------------------------------------------------------
def positional_encoding(x: jnp.ndarray, pe: jnp.ndarray, *,
                        dropout_p: float = 0.1,
                        training: bool = False,
                        rng_key=None) -> jnp.ndarray:
    """x: (B, S, D); pe: (max_len, d_model) with max_len >= S, d_model >= D."""
    B, S, D = x.shape
    pe_sd = pe[:S, :D].astype(x.dtype)          # same slice torch does

    # Lane-dense 2-D view: (B, S*D). The PE add is per-(s, d), so flattening
    # seq and feature together keeps x/pe column slices aligned.
    cols = S * D
    x2 = x.reshape(B, cols)
    pe2 = pe_sd.reshape(1, cols)

    tb = _row_tile(B)
    tc = _col_tile(cols, tb, jnp.dtype(x.dtype).itemsize)
    grid = (cols // tc, B // tb)                # column tiles OUTER, batch INNER

    x_spec = pl.BlockSpec((tb, tc), lambda c, b: (b, c))
    pe_spec = pl.BlockSpec((1, tc), lambda c, b: (0, c))   # constant over inner axis
    out_spec = pl.BlockSpec((tb, tc), lambda c, b: (b, c))
    cparams = pltpu.CompilerParams(
        dimension_semantics=("parallel", "parallel"))

    if (not training) or dropout_p == 0.0:
        # Eval mode: dropout is identity -> pure broadcast-add kernel.
        out2 = pl.pallas_call(
            _pe_add_kernel,
            out_shape=jax.ShapeDtypeStruct((B, cols), x.dtype),
            grid=grid,
            in_specs=[x_spec, pe_spec],
            out_specs=out_spec,
            compiler_params=cparams,
        )(x2, pe2)
        return out2.reshape(B, S, D)

    # Training mode: inverted dropout. Keep-mask generated with jax.random so
    # the kernel is portable (no TPU-only PRNG primitives); the masked scale
    # is fused in-kernel.
    if rng_key is None:
        rng_key = jax.random.PRNGKey(0)
    keep = jax.random.bernoulli(rng_key, 1.0 - dropout_p,
                                shape=(B, cols)).astype(x.dtype)
    kernel = functools.partial(_pe_add_dropout_kernel,
                               scale=float(1.0 / (1.0 - dropout_p)))
    out2 = pl.pallas_call(
        kernel,
        out_shape=jax.ShapeDtypeStruct((B, cols), x.dtype),
        grid=grid,
        in_specs=[x_spec, pe_spec, x_spec],
        out_specs=out_spec,
        compiler_params=cparams,
    )(x2, pe2, keep)
    return out2.reshape(B, S, D)


# ----------------------------------------------------------------------------
# Demo / smoke test
# ----------------------------------------------------------------------------
if __name__ == "__main__":
    B, S, D = 2, 8, 32          # batch, seq_len, dim_encoder
    MAX_LEN = 16
    DROPOUT_P = 0.1

    key = jax.random.PRNGKey(0)
    k_x, k_drop = jax.random.split(key)
    x = jax.random.normal(k_x, (B, S, D), dtype=jnp.float32)
    pe = make_positional_encoding_table(MAX_LEN, D)

    ref = x + pe[:S, :D][None, :, :]

    # Eval-mode path (dropout = identity), compare against pure-JAX reference.
    out_eval = jax.block_until_ready(
        positional_encoding(x, pe, dropout_p=DROPOUT_P, training=False))
    assert out_eval.shape == (B, S, D)
    assert jnp.allclose(out_eval, ref, atol=1e-6, rtol=1e-6), "eval-mode mismatch"

    # Training-mode path: surviving elements equal ref/(1-p); dropped are 0.
    out_train = jax.block_until_ready(
        positional_encoding(x, pe, dropout_p=DROPOUT_P, training=True,
                            rng_key=k_drop))
    assert out_train.shape == (B, S, D)
    scaled_ref = ref / (1.0 - DROPOUT_P)
    ok = jnp.all(jnp.isclose(out_train, scaled_ref, atol=1e-5, rtol=1e-5)
                 | (out_train == 0.0))
    assert bool(ok), "training-mode dropout semantics mismatch"

    print("KERNEL_OK")
</pallas_src>

<mosaic_0001>
module attributes {stable_mosaic.version = 11 : i64} {
  func.func @_pe_add_kernel(%arg0: i32, %arg1: i32, %arg2: memref<2x256xf32, #tpu.memory_space<vmem>>, %arg3: memref<1x256xf32, #tpu.memory_space<vmem>>, %arg4: memref<2x256xf32, #tpu.memory_space<vmem>>) attributes {dimension_semantics = [#tpu.dimension_semantics<parallel>, #tpu.dimension_semantics<parallel>], iteration_bounds = array<i64: 1, 1>, scalar_prefetch = 0 : i64, scratch_operands = 0 : i64, tpu.core_type = #tpu.core_type<tc>, window_params = [{transform_indices = @transform_0, window_bounds = array<i64: 2, 256>}, {transform_indices = @transform_1, window_bounds = array<i64: 1, 256>}, {transform_indices = @transform_2, window_bounds = array<i64: 2, 256>}]} {
    %c0 = arith.constant 0 : index
    %c0_0 = arith.constant 0 : index
    %0 = vector.load %arg2[%c0, %c0_0] : memref<2x256xf32, #tpu.memory_space<vmem>>, vector<2x256xf32>
    %c0_1 = arith.constant 0 : index
    %c0_2 = arith.constant 0 : index
    %1 = vector.load %arg3[%c0_1, %c0_2] : memref<1x256xf32, #tpu.memory_space<vmem>>, vector<1x256xf32>
    %2 = vector.broadcast %1 : vector<1x256xf32> to vector<2x256xf32>
    %3 = arith.addf %0, %2 : vector<2x256xf32>
    %c0_3 = arith.constant 0 : index
    %c0_4 = arith.constant 0 : index
    %4 = vector.load %arg4[%c0_3, %c0_4] : memref<2x256xf32, #tpu.memory_space<vmem>>, vector<2x256xf32>
    tpu.vector_store %arg4[%c0_3, %c0_4], %3 {strides = array<i32>} : memref<2x256xf32, #tpu.memory_space<vmem>>, vector<2x256xf32>,
    return
  }
  func.func @transform_0(%arg0: i32, %arg1: i32) -> (i32, i32) {
    %c0_i32 = arith.constant 0 : i32
    return %arg1, %arg0 : i32, i32
  }
  func.func @transform_1(%arg0: i32, %arg1: i32) -> (i32, i32) {
    %c0_i32 = arith.constant 0 : i32
    %c0_i32_0 = arith.constant 0 : i32
    return %c0_i32, %arg0 : i32, i32
  }
  func.func @transform_2(%arg0: i32, %arg1: i32) -> (i32, i32) {
    %c0_i32 = arith.constant 0 : i32
    return %arg1, %arg0 : i32, i32
  }
}

</mosaic_0001>

<llo_original>
// kernel: tpu_custom_call.1
$region0: #{tpu_custom_call.1}
  #allocation0 [shape = 'u32[]', space=smem, size = 0x4, offset = 0x4, fixed_abs, tag = 'smem constant byte address 0x4 - core index']
  #allocation1 [shape = 'u32[144,128]{1,0:T(1,128)}', space=vmem, size = 0x12000, scoped, tag = 'internal scratch']
  %s0 = inlined_call_operand.hbm [shape: f32[2,256], index: 0, kind: input, shape index: {}]
  %s1 = inlined_call_operand.hbm [shape: f32[1,256], index: 1, kind: input, shape index: {}]
  %s2 = inlined_call_operand.hbm [shape: f32[2,256], index: 2, kind: output, shape index: {}]
  %s3 = sld [smem:[#allocation0]]
  $region26: #{tpu_custom_call.1} parent=0
    _
  %s5 = ssub.s32 1, %s3
  %s6 = scalar_select 0, %s5, %s3
  $region1: #{tpu_custom_call.1} parent=0
    #allocation2 [shape = 'u8[2048]{0}', space=vmem, size = 0x800, scoped, tag = 'input window, operand 0, single buffered']
    #allocation3 [shape = 's32[1]{0}', space=sflag, size = 0x4, scoped, tag = 'scoped memory for tpu_custom_call.1']
    #allocation4 [shape = 's32[1]{0}', space=sflag, size = 0x4, scoped, tag = 'scoped memory for tpu_custom_call.1']
    #allocation5 [shape = 'u8[1024]{0}', space=vmem, size = 0x400, scoped, tag = 'input window, operand 1, single buffered']
    #allocation6 [shape = 's32[1]{0}', space=sflag, size = 0x4, scoped, tag = 'scoped memory for tpu_custom_call.1']
    #allocation7 [shape = 'u8[2048]{0}', space=vmem, size = 0x800, scoped, tag = 'output window, operand 0, single buffered']
    %7 = vsyncpa [#allocation3], 0
    %8 = vsyncpa [#allocation6], 0
    %9 = vsyncpa [#allocation4], 0
    // Predicated region
    $region2: #{tpu_custom_call.1} parent=1 // pred_check
      _
    $region3: #{tpu_custom_call.1} parent=1 // pred_check_branch
      %11 = sbr.rel (0) target = $region5
    $region4: #{tpu_custom_call.1} parent=1 // pred_region
      %s13 = ssub.s32 64, 64
      %14 = vsyncadd [#allocation3], %s13
      %s16 = sshll.u32 [#allocation2], 4
      %s17 = int_to_ptr.vmem [resolvable:$true] %s16
      %19 = dma.hbm_to_vmem [thread:$0]  %s0, 64, %s17, [#allocation3]
    $region5: #{tpu_custom_call.1} parent=1 // pred_fallthru
      _
    // Predicated region
    $region6: #{tpu_custom_call.1} parent=1 // pred_check
      _
    $region7: #{tpu_custom_call.1} parent=1 // pred_check_branch
      %21 = sbr.rel (0) target = $region9
    $region8: #{tpu_custom_call.1} parent=1 // pred_region
      %s23 = ssub.s32 32, 32
      %24 = vsyncadd [#allocation6], %s23
      %s26 = sshll.u32 [#allocation5], 4
      %s27 = int_to_ptr.vmem [resolvable:$true] %s26
      %29 = dma.hbm_to_vmem [thread:$0]  %s1, 32, %s27, [#allocation6]
    $region9: #{tpu_custom_call.1} parent=1 // pred_fallthru
      _
    // Predicated region
    $region10: #{tpu_custom_call.1} parent=1 // pred_check
      _
    $region11: #{tpu_custom_call.1} parent=1 // pred_check_branch
      %31 = sbr.rel (0) target = $region13
    $region12: #{tpu_custom_call.1} parent=1 // pred_region
      %32 = dma.done [#allocation3], 64
    $region13: #{tpu_custom_call.1} parent=1 // pred_fallthru
      _
    // Predicated region
    $region14: #{tpu_custom_call.1} parent=1 // pred_check
      _
    $region15: #{tpu_custom_call.1} parent=1 // pred_check_branch
      %34 = sbr.rel (0) target = $region17
    $region16: #{tpu_custom_call.1} parent=1 // pred_region
      %35 = dma.done [#allocation6], 32
    $region17: #{tpu_custom_call.1} parent=1 // pred_fallthru
      _
    %v36 = vld [vmem:[#allocation2] sm:$0xf]
    %v37 = vld [vmem:[#allocation5] sm:$0x3]
    %v39 = vlaneseq
    %v40 = vshrl.u32 %v39, 7
    %v41 = vsub.s32 0, %v40
    %v42 = vrot.slane %v37, %v41
    %v43 = vlaneseq
    %v44 = vshrl.u32 %v43, 7
    %v45 = vsub.s32 1, %v44
    %v46 = vrot.slane %v37, %v45
    %v47 = vcombine.low %v42, %v46
    %v49 = vunpack.c.l.s4 1983009808
    %v50 = vunpack.c.0.s8 %v49
    %v51 = vlaneseq
    %v52 = vshrl.u32 %v51, 7
    %v53 = vsub.s32 %v50, %v52
    %v54 = vrot.slane %v47, %v53
    %v56 = vadd.f32 %v36, %v54
    %57 = vst [vmem:[#allocation7] sm:$0xf] %v56
    // Predicated region
    $region18: #{tpu_custom_call.1} parent=1 // pred_check
      _
    $region19: #{tpu_custom_call.1} parent=1 // pred_check_branch
      %59 = sbr.rel (0) target = $region21
    $region20: #{tpu_custom_call.1} parent=1 // pred_region
      %s61 = ssub.s32 64, 64
      %62 = vsyncadd [#allocation4], %s61
      %s64 = sshll.u32 [#allocation7], 4
      %s65 = int_to_ptr.vmem [resolvable:$true] %s64
      %67 = dma.vmem_to_hbm [thread:$0]  %s65, 64, %s2, [#allocation4]
    $region21: #{tpu_custom_call.1} parent=1 // pred_fallthru
      _
    // Predicated region
    $region22: #{tpu_custom_call.1} parent=1 // pred_check
      _
    $region23: #{tpu_custom_call.1} parent=1 // pred_check_branch
      %69 = sbr.rel (0) target = $region25
    $region24: #{tpu_custom_call.1} parent=1 // pred_region
      %70 = dma.done [#allocation4], 64
    $region25: #{tpu_custom_call.1} parent=1 // pred_fallthru
      _
    %71 = vsyncpa [#allocation3], 1
    %72 = vsyncpa [#allocation6], 1
    %73 = vsyncpa [#allocation4], 1

</llo_original>
